<compile_context>
chip_gen: v5e
topology: v5e:2x2
jax: 0.10.0
libtpu: 0.0.40
codegen_flags: <defaults>
</compile_context>

<pallas_src>
import functools

import jax
import jax.numpy as jnp
from jax import lax
from jax.experimental import pallas as pl
from jax.experimental.pallas import tpu as pltpu


def _round_up(x, m):
    return (x + m - 1) // m * m


def _heads_per_group(n_heads, head_dim, target_width=256):
    """Largest divisor of n_heads whose group width (hg * head_dim) <= target."""
    hg = max(1, min(n_heads, target_width // max(1, head_dim)))
    while n_heads % hg:
        hg -= 1
    return hg


def attention_kernel(x_ref, wq_ref, wk_ref, wv_ref, wp_ref, bqkv_ref, bp_ref,
                     o_ref, acc_ref, *, head_dim, heads_per_group, n_valid):
    """One grid step = one sample: full multi-head attention + output proj.

    Weights are VMEM-resident (constant index_map -> fetched once).  Heads are
    processed in MXU-width groups; the head-concat + output projection are
    fused as  proj(concat_h o_h) = sum_g (concat_{h in g} o_h) @ Wp[g].
    """
    x = x_ref[...]                                   # (n_pad, dim), compute dtype
    cdt = x.dtype
    n_pad = x.shape[0]
    n_groups = wq_ref.shape[0]

    acc_ref[...] = jnp.zeros_like(acc_ref)

    # Key-padding mask (static: only built when the token dim was padded).
    if n_valid != n_pad:
        col = lax.broadcasted_iota(jnp.int32, (n_pad, n_pad), 1)
        key_mask = jnp.where(col >= n_valid, jnp.float32(-1e30), jnp.float32(0.0))
    else:
        key_mask = None

    for g in range(n_groups):                        # static loop over head groups
        # Group-wide projections: (n_pad, dim) @ (dim, hg*head_dim), f32 accum.
        # Wq / bq were pre-scaled by head_dim**-0.5 on the host.
        qg = (jnp.dot(x, wq_ref[g], preferred_element_type=jnp.float32)
              + bqkv_ref[g, 0]).astype(cdt)
        kg = (jnp.dot(x, wk_ref[g], preferred_element_type=jnp.float32)
              + bqkv_ref[g, 1]).astype(cdt)
        vg = (jnp.dot(x, wv_ref[g], preferred_element_type=jnp.float32)
              + bqkv_ref[g, 2]).astype(cdt)

        head_outs = []
        for i in range(heads_per_group):             # static loop over group heads
            lo = i * head_dim
            q_h = qg[:, lo:lo + head_dim]
            k_h = kg[:, lo:lo + head_dim]
            v_h = vg[:, lo:lo + head_dim]

            # scores = q @ k^T : contract over head_dim directly (no XLU k.T).
            s = lax.dot_general(q_h, k_h, (((1,), (1,)), ((), ())),
                                preferred_element_type=jnp.float32)   # (n_pad, n_pad)
            if key_mask is not None:
                s = s + key_mask
            s = s - jnp.max(s, axis=-1, keepdims=True)
            p = jnp.exp(s)
            # Deferred normalization: EUP reciprocal applied to the small
            # (n_pad, head_dim) P@V result, not the (n_pad, n_pad) tile.
            r = pl.reciprocal(jnp.sum(p, axis=-1, keepdims=True), approx=True)
            ho = jnp.dot(p.astype(cdt), v_h,
                         preferred_element_type=jnp.float32) * r      # (n_pad, hd)
            head_outs.append(ho.astype(cdt))

        group_out = (head_outs[0] if heads_per_group == 1
                     else jnp.concatenate(head_outs, axis=-1))         # (n_pad, hg*hd)

        # Fused head-concat + output projection (contraction depth hg*hd).
        acc_ref[...] += jnp.dot(group_out, wp_ref[g],
                                preferred_element_type=jnp.float32)    # (n_pad, dim)

    o_ref[...] = (acc_ref[...] + bp_ref[...]).astype(o_ref.dtype)


def attention_forward(x, w_qkv, b_qkv, w_proj, b_proj, *, n_heads,
                      compute_dtype=jnp.bfloat16, mxu_width=256):
    """y = Attention(x).  Parameters stored so y = x @ W + b (torch weights
    pre-transposed).  compute_dtype controls the MXU operand dtype; all
    accumulation and softmax math is f32."""
    B, N, dim = x.shape
    assert dim % n_heads == 0, "dim must be divisible by n_heads"
    head_dim = dim // n_heads
    scale = head_dim ** (-0.5)
    out_dtype = x.dtype

    hg = _heads_per_group(n_heads, head_dim, mxu_width)
    n_groups = n_heads // hg
    gw = hg * head_dim                                   # head-group width

    # Pad the token dim: to a multiple of 128 for long sequences (lane-dense
    # score tiles), otherwise just to the f32 sublane multiple of 8.
    n_pad = _round_up(N, 128) if N > 128 else _round_up(N, 8)
    if n_pad != N:
        x = jnp.pad(x, ((0, 0), (0, n_pad - N), (0, 0)))

    b_qkv = jnp.asarray(b_qkv).reshape(3 * dim)          # robust to (3*dim,) or (1, 3*dim)
    b_proj = jnp.asarray(b_proj).reshape(1, dim)

    # Host-side (one-time) weight prep: per-group blocks, scale folded into Q.
    w_q = (w_qkv[:, 0 * dim:1 * dim] * scale).reshape(dim, n_groups, gw).transpose(1, 0, 2)
    w_k = w_qkv[:, 1 * dim:2 * dim].reshape(dim, n_groups, gw).transpose(1, 0, 2)
    w_v = w_qkv[:, 2 * dim:3 * dim].reshape(dim, n_groups, gw).transpose(1, 0, 2)
    w_p = w_proj.reshape(n_groups, gw, dim)              # rows g*gw:(g+1)*gw of W_p
    b_q = (b_qkv[0 * dim:1 * dim] * scale).reshape(n_groups, 1, gw)
    b_k = b_qkv[1 * dim:2 * dim].reshape(n_groups, 1, gw)
    b_v = b_qkv[2 * dim:3 * dim].reshape(n_groups, 1, gw)
    bqkv = jnp.stack([b_q, b_k, b_v], axis=1).astype(jnp.float32)     # (G, 3, 1, gw)

    xc = x.astype(compute_dtype)
    w_q = w_q.astype(compute_dtype)
    w_k = w_k.astype(compute_dtype)
    w_v = w_v.astype(compute_dtype)
    w_p = w_p.astype(compute_dtype)
    b_p = b_proj.astype(jnp.float32)

    kernel = functools.partial(attention_kernel, head_dim=head_dim,
                               heads_per_group=hg, n_valid=N)

    # VMEM budget: resident weights (double-buffered by the pipeline), streamed
    # x/out blocks, the f32 accumulator and the per-group / score working set.
    ci = jnp.dtype(compute_dtype).itemsize
    oi = jnp.dtype(out_dtype).itemsize
    resident = 4 * dim * dim * ci + 4 * dim * 4
    streamed = 2 * n_pad * dim * (ci + oi)
    working = n_pad * dim * 4 + 2 * n_pad * n_pad * 4 + 8 * n_pad * gw * 4
    vmem_limit = int(min(48 * 2 ** 20,
                         max(8 * 2 ** 20, 2 * (2 * resident + streamed + working))))

    out = pl.pallas_call(
        kernel,
        out_shape=jax.ShapeDtypeStruct((B, n_pad, dim), out_dtype),
        grid_spec=pltpu.PrefetchScalarGridSpec(
            num_scalar_prefetch=0,
            grid=(B,),                                   # one step per sample
            in_specs=[
                pl.BlockSpec((None, n_pad, dim), lambda b: (b, 0, 0)),       # x
                # Constant index maps -> weights/biases DMA'd from HBM once.
                pl.BlockSpec((n_groups, dim, gw), lambda b: (0, 0, 0)),      # wq (scaled)
                pl.BlockSpec((n_groups, dim, gw), lambda b: (0, 0, 0)),      # wk
                pl.BlockSpec((n_groups, dim, gw), lambda b: (0, 0, 0)),      # wv
                pl.BlockSpec((n_groups, gw, dim), lambda b: (0, 0, 0)),      # wp
                pl.BlockSpec((n_groups, 3, 1, gw), lambda b: (0, 0, 0, 0)),  # qkv bias
                pl.BlockSpec((1, dim), lambda b: (0, 0)),                    # proj bias
            ],
            out_specs=pl.BlockSpec((None, n_pad, dim), lambda b: (b, 0, 0)),
            scratch_shapes=[pltpu.VMEM((n_pad, dim), jnp.float32)],          # f32 acc
        ),
        compiler_params=pltpu.CompilerParams(
            dimension_semantics=("parallel",),           # batch axis across cores
            vmem_limit_bytes=vmem_limit,
        ),
    )(xc, w_q, w_k, w_v, w_p, bqkv, b_p)

    return out[:, :N, :] if n_pad != N else out


def attention_reference(x, w_qkv, b_qkv, w_proj, b_proj, *, n_heads):
    """Pure-JAX reference mirroring the PyTorch forward, for validation."""
    B, N, dim = x.shape
    head_dim = dim // n_heads
    scale = head_dim ** (-0.5)
    qkv = x @ w_qkv + jnp.asarray(b_qkv).reshape(1, 3 * dim)          # (B, N, 3*dim)
    qkv = qkv.reshape(B, N, 3, n_heads, head_dim).transpose(2, 0, 3, 1, 4)
    q, k, v = qkv[0], qkv[1], qkv[2]                                  # (B, H, N, hd)
    s = jnp.einsum("bhnd,bhmd->bhnm", q, k) * scale
    attn = jax.nn.softmax(s, axis=-1)
    wa = jnp.einsum("bhnm,bhmd->bhnd", attn, v)                       # (B, H, N, hd)
    wa = wa.transpose(0, 2, 1, 3).reshape(B, N, dim)
    return wa @ w_proj + jnp.asarray(b_proj).reshape(1, dim)


if __name__ == "__main__":
    # Small shapes consistent with the module: dim divisible by n_heads.
    B, N, DIM, HEADS = 2, 8, 32, 4

    key = jax.random.PRNGKey(0)
    k_x, k_wqkv, k_bqkv, k_wproj, k_bproj = jax.random.split(key, 5)

    x = jax.random.normal(k_x, (B, N, DIM), dtype=jnp.float32)
    w_qkv = 0.02 * jax.random.normal(k_wqkv, (DIM, 3 * DIM), dtype=jnp.float32)
    b_qkv = 0.02 * jax.random.normal(k_bqkv, (1, 3 * DIM), dtype=jnp.float32)
    w_proj = 0.02 * jax.random.normal(k_wproj, (DIM, DIM), dtype=jnp.float32)
    b_proj = 0.02 * jax.random.normal(k_bproj, (1, DIM), dtype=jnp.float32)

    ref = attention_reference(x, w_qkv, b_qkv, w_proj, b_proj, n_heads=HEADS)

    # f32 operand path (validation-tight).
    out_f32 = jax.block_until_ready(
        attention_forward(x, w_qkv, b_qkv, w_proj, b_proj,
                          n_heads=HEADS, compute_dtype=jnp.float32))
    assert out_f32.shape == (B, N, DIM)
    assert jnp.allclose(out_f32, ref, atol=2e-3, rtol=2e-3), "f32 mismatch vs reference"

    # bf16 MXU-operand path (f32 accumulation) — valid on v5e / v6e / v7x.
    out_bf16 = jax.block_until_ready(
        attention_forward(x, w_qkv, b_qkv, w_proj, b_proj,
                          n_heads=HEADS, compute_dtype=jnp.bfloat16))
    assert out_bf16.shape == (B, N, DIM)
    assert jnp.allclose(out_bf16, ref, atol=5e-2, rtol=5e-2), "bf16 mismatch vs reference"

    # Ragged token count: exercises the pad-to-sublane + key-mask path.
    N2 = 7
    x2 = x[:, :N2, :]
    ref2 = attention_reference(x2, w_qkv, b_qkv, w_proj, b_proj, n_heads=HEADS)
    out2 = jax.block_until_ready(
        attention_forward(x2, w_qkv, b_qkv, w_proj, b_proj,
                          n_heads=HEADS, compute_dtype=jnp.float32))
    assert out2.shape == (B, N2, DIM)
    assert jnp.allclose(out2, ref2, atol=2e-3, rtol=2e-3), "padded-N mismatch vs reference"

    print("KERNEL_OK")
</pallas_src>

<mosaic_0001>
module attributes {stable_mosaic.version = 11 : i64} {
  func.func @attention_kernel(%arg0: i32, %arg1: memref<1x8x32xf32, #tpu.memory_space<vmem>>, %arg2: memref<1x32x32xf32, #tpu.memory_space<vmem>>, %arg3: memref<1x32x32xf32, #tpu.memory_space<vmem>>, %arg4: memref<1x32x32xf32, #tpu.memory_space<vmem>>, %arg5: memref<1x32x32xf32, #tpu.memory_space<vmem>>, %arg6: memref<1x3x1x32xf32, #tpu.memory_space<vmem>>, %arg7: memref<1x32xf32, #tpu.memory_space<vmem>>, %arg8: memref<1x8x32xf32, #tpu.memory_space<vmem>>, %arg9: memref<8x32xf32, #tpu.memory_space<vmem>>) attributes {dimension_semantics = [#tpu.dimension_semantics<parallel>], iteration_bounds = array<i64: 2>, scalar_prefetch = 0 : i64, scratch_operands = 1 : i64, tpu.core_type = #tpu.core_type<tc>, window_params = [{transform_indices = @transform_0, window_bounds = array<i64: 1, 8, 32>}, {pipeline_mode = #tpu.pipeline_mode<synchronous>, transform_indices = @transform_1, window_bounds = array<i64: 1, 32, 32>}, {pipeline_mode = #tpu.pipeline_mode<synchronous>, transform_indices = @transform_2, window_bounds = array<i64: 1, 32, 32>}, {pipeline_mode = #tpu.pipeline_mode<synchronous>, transform_indices = @transform_3, window_bounds = array<i64: 1, 32, 32>}, {pipeline_mode = #tpu.pipeline_mode<synchronous>, transform_indices = @transform_4, window_bounds = array<i64: 1, 32, 32>}, {pipeline_mode = #tpu.pipeline_mode<synchronous>, transform_indices = @transform_5, window_bounds = array<i64: 1, 3, 1, 32>}, {pipeline_mode = #tpu.pipeline_mode<synchronous>, transform_indices = @transform_6, window_bounds = array<i64: 1, 32>}, {transform_indices = @transform_7, window_bounds = array<i64: 1, 8, 32>}]} {
    %c0 = arith.constant 0 : index
    %c0_0 = arith.constant 0 : index
    %c0_1 = arith.constant 0 : index
    %0 = vector.load %arg1[%c0, %c0_0, %c0_1] : memref<1x8x32xf32, #tpu.memory_space<vmem>>, vector<1x8x32xf32>
    %1 = vector.shape_cast %0 : vector<1x8x32xf32> to vector<8x32xf32>
    %cst = arith.constant 0.000000e+00 : f32
    %2 = vector.broadcast %cst : f32 to vector<8x32xf32>
    %c0_2 = arith.constant 0 : index
    %c0_3 = arith.constant 0 : index
    %3 = vector.load %arg9[%c0_2, %c0_3] : memref<8x32xf32, #tpu.memory_space<vmem>>, vector<8x32xf32>
    tpu.vector_store %arg9[%c0_2, %c0_3], %2 {strides = array<i32>} : memref<8x32xf32, #tpu.memory_space<vmem>>, vector<8x32xf32>,
    %c0_4 = arith.constant 0 : index
    %c0_5 = arith.constant 0 : index
    %c0_6 = arith.constant 0 : index
    %4 = vector.load %arg2[%c0_4, %c0_5, %c0_6] : memref<1x32x32xf32, #tpu.memory_space<vmem>>, vector<1x32x32xf32>
    %5 = vector.shape_cast %4 : vector<1x32x32xf32> to vector<32x32xf32>
    %cst_7 = arith.constant dense<0.000000e+00> : vector<8x32xf32>
    %6 = tpu.matmul %1, %5, %cst_7 {dimension_numbers = #tpu.dot_dimension_numbers<[1], [0], [0], [1], [0, 0, 1, 1], [], []>} : vector<8x32xf32>, vector<32x32xf32>, vector<8x32xf32> -> vector<8x32xf32>
    %c0_8 = arith.constant 0 : index
    %c0_9 = arith.constant 0 : index
    %c0_10 = arith.constant 0 : index
    %c0_11 = arith.constant 0 : index
    %7 = vector.load %arg6[%c0_8, %c0_9, %c0_10, %c0_11] : memref<1x3x1x32xf32, #tpu.memory_space<vmem>>, vector<1x1x1x32xf32>
    %8 = vector.shape_cast %7 : vector<1x1x1x32xf32> to vector<1x32xf32>
    %9 = vector.broadcast %8 : vector<1x32xf32> to vector<8x32xf32>
    %10 = arith.addf %6, %9 : vector<8x32xf32>
    %c0_12 = arith.constant 0 : index
    %c0_13 = arith.constant 0 : index
    %c0_14 = arith.constant 0 : index
    %11 = vector.load %arg3[%c0_12, %c0_13, %c0_14] : memref<1x32x32xf32, #tpu.memory_space<vmem>>, vector<1x32x32xf32>
    %12 = vector.shape_cast %11 : vector<1x32x32xf32> to vector<32x32xf32>
    %cst_15 = arith.constant dense<0.000000e+00> : vector<8x32xf32>
    %13 = tpu.matmul %1, %12, %cst_15 {dimension_numbers = #tpu.dot_dimension_numbers<[1], [0], [0], [1], [0, 0, 1, 1], [], []>} : vector<8x32xf32>, vector<32x32xf32>, vector<8x32xf32> -> vector<8x32xf32>
    %c0_16 = arith.constant 0 : index
    %c1 = arith.constant 1 : index
    %c0_17 = arith.constant 0 : index
    %c0_18 = arith.constant 0 : index
    %14 = vector.load %arg6[%c0_16, %c1, %c0_17, %c0_18] : memref<1x3x1x32xf32, #tpu.memory_space<vmem>>, vector<1x1x1x32xf32>
    %15 = vector.shape_cast %14 : vector<1x1x1x32xf32> to vector<1x32xf32>
    %16 = vector.broadcast %15 : vector<1x32xf32> to vector<8x32xf32>
    %17 = arith.addf %13, %16 : vector<8x32xf32>
    %c0_19 = arith.constant 0 : index
    %c0_20 = arith.constant 0 : index
    %c0_21 = arith.constant 0 : index
    %18 = vector.load %arg4[%c0_19, %c0_20, %c0_21] : memref<1x32x32xf32, #tpu.memory_space<vmem>>, vector<1x32x32xf32>
    %19 = vector.shape_cast %18 : vector<1x32x32xf32> to vector<32x32xf32>
    %cst_22 = arith.constant dense<0.000000e+00> : vector<8x32xf32>
    %20 = tpu.matmul %1, %19, %cst_22 {dimension_numbers = #tpu.dot_dimension_numbers<[1], [0], [0], [1], [0, 0, 1, 1], [], []>} : vector<8x32xf32>, vector<32x32xf32>, vector<8x32xf32> -> vector<8x32xf32>
    %c0_23 = arith.constant 0 : index
    %c2 = arith.constant 2 : index
    %c0_24 = arith.constant 0 : index
    %c0_25 = arith.constant 0 : index
    %21 = vector.load %arg6[%c0_23, %c2, %c0_24, %c0_25] : memref<1x3x1x32xf32, #tpu.memory_space<vmem>>, vector<1x1x1x32xf32>
    %22 = vector.shape_cast %21 : vector<1x1x1x32xf32> to vector<1x32xf32>
    %23 = vector.broadcast %22 : vector<1x32xf32> to vector<8x32xf32>
    %24 = arith.addf %20, %23 : vector<8x32xf32>
    %25 = vector.extract_strided_slice %10 {offsets = [0, 0], sizes = [8, 8], strides = [1, 1]} : vector<8x32xf32> to vector<8x8xf32>
    %26 = vector.extract_strided_slice %17 {offsets = [0, 0], sizes = [8, 8], strides = [1, 1]} : vector<8x32xf32> to vector<8x8xf32>
    %27 = vector.extract_strided_slice %24 {offsets = [0, 0], sizes = [8, 8], strides = [1, 1]} : vector<8x32xf32> to vector<8x8xf32>
    %cst_26 = arith.constant dense<0.000000e+00> : vector<8x8xf32>
    %28 = tpu.matmul %25, %26, %cst_26 {dimension_numbers = #tpu.dot_dimension_numbers<[1], [1], [0], [0], [0, 0, 1, 0], [], []>} : vector<8x8xf32>, vector<8x8xf32>, vector<8x8xf32> -> vector<8x8xf32>
    %cst_27 = arith.constant dense<0xFF800000> : vector<8xf32>
    %29 = vector.multi_reduction <maximumf>, %28, %cst_27 [1] : vector<8x8xf32> to vector<8xf32>
    %30 = vector.shape_cast %29 : vector<8xf32> to vector<8x1xf32>
    %31 = vector.broadcast %30 : vector<8x1xf32> to vector<8x8xf32>
    %32 = arith.subf %28, %31 : vector<8x8xf32>
    %33 = math.exp %32 : vector<8x8xf32>
    %cst_28 = arith.constant dense<0.000000e+00> : vector<8xf32>
    %34 = vector.multi_reduction <add>, %33, %cst_28 [1] : vector<8x8xf32> to vector<8xf32>
    %35 = vector.shape_cast %34 : vector<8xf32> to vector<8x1xf32>
    %36 = tpu.reciprocal %35 {approx = true} : vector<8x1xf32> -> vector<8x1xf32>
    %cst_29 = arith.constant dense<0.000000e+00> : vector<8x8xf32>
    %37 = tpu.matmul %33, %27, %cst_29 {dimension_numbers = #tpu.dot_dimension_numbers<[1], [0], [0], [1], [0, 0, 1, 1], [], []>} : vector<8x8xf32>, vector<8x8xf32>, vector<8x8xf32> -> vector<8x8xf32>
    %38 = vector.broadcast %36 : vector<8x1xf32> to vector<8x8xf32>
    %39 = arith.mulf %37, %38 : vector<8x8xf32>
    %40 = vector.extract_strided_slice %10 {offsets = [0, 8], sizes = [8, 8], strides = [1, 1]} : vector<8x32xf32> to vector<8x8xf32>
    %41 = vector.extract_strided_slice %17 {offsets = [0, 8], sizes = [8, 8], strides = [1, 1]} : vector<8x32xf32> to vector<8x8xf32>
    %42 = vector.extract_strided_slice %24 {offsets = [0, 8], sizes = [8, 8], strides = [1, 1]} : vector<8x32xf32> to vector<8x8xf32>
    %cst_30 = arith.constant dense<0.000000e+00> : vector<8x8xf32>
    %43 = tpu.matmul %40, %41, %cst_30 {dimension_numbers = #tpu.dot_dimension_numbers<[1], [1], [0], [0], [0, 0, 1, 0], [], []>} : vector<8x8xf32>, vector<8x8xf32>, vector<8x8xf32> -> vector<8x8xf32>
    %cst_31 = arith.constant dense<0xFF800000> : vector<8xf32>
    %44 = vector.multi_reduction <maximumf>, %43, %cst_31 [1] : vector<8x8xf32> to vector<8xf32>
    %45 = vector.shape_cast %44 : vector<8xf32> to vector<8x1xf32>
    %46 = vector.broadcast %45 : vector<8x1xf32> to vector<8x8xf32>
    %47 = arith.subf %43, %46 : vector<8x8xf32>
    %48 = math.exp %47 : vector<8x8xf32>
    %cst_32 = arith.constant dense<0.000000e+00> : vector<8xf32>
    %49 = vector.multi_reduction <add>, %48, %cst_32 [1] : vector<8x8xf32> to vector<8xf32>
    %50 = vector.shape_cast %49 : vector<8xf32> to vector<8x1xf32>
    %51 = tpu.reciprocal %50 {approx = true} : vector<8x1xf32> -> vector<8x1xf32>
    %cst_33 = arith.constant dense<0.000000e+00> : vector<8x8xf32>
    %52 = tpu.matmul %48, %42, %cst_33 {dimension_numbers = #tpu.dot_dimension_numbers<[1], [0], [0], [1], [0, 0, 1, 1], [], []>} : vector<8x8xf32>, vector<8x8xf32>, vector<8x8xf32> -> vector<8x8xf32>
    %53 = vector.broadcast %51 : vector<8x1xf32> to vector<8x8xf32>
    %54 = arith.mulf %52, %53 : vector<8x8xf32>
    %55 = vector.extract_strided_slice %10 {offsets = [0, 16], sizes = [8, 8], strides = [1, 1]} : vector<8x32xf32> to vector<8x8xf32>
    %56 = vector.extract_strided_slice %17 {offsets = [0, 16], sizes = [8, 8], strides = [1, 1]} : vector<8x32xf32> to vector<8x8xf32>
    %57 = vector.extract_strided_slice %24 {offsets = [0, 16], sizes = [8, 8], strides = [1, 1]} : vector<8x32xf32> to vector<8x8xf32>
    %cst_34 = arith.constant dense<0.000000e+00> : vector<8x8xf32>
    %58 = tpu.matmul %55, %56, %cst_34 {dimension_numbers = #tpu.dot_dimension_numbers<[1], [1], [0], [0], [0, 0, 1, 0], [], []>} : vector<8x8xf32>, vector<8x8xf32>, vector<8x8xf32> -> vector<8x8xf32>
    %cst_35 = arith.constant dense<0xFF800000> : vector<8xf32>
    %59 = vector.multi_reduction <maximumf>, %58, %cst_35 [1] : vector<8x8xf32> to vector<8xf32>
    %60 = vector.shape_cast %59 : vector<8xf32> to vector<8x1xf32>
    %61 = vector.broadcast %60 : vector<8x1xf32> to vector<8x8xf32>
    %62 = arith.subf %58, %61 : vector<8x8xf32>
    %63 = math.exp %62 : vector<8x8xf32>
    %cst_36 = arith.constant dense<0.000000e+00> : vector<8xf32>
    %64 = vector.multi_reduction <add>, %63, %cst_36 [1] : vector<8x8xf32> to vector<8xf32>
    %65 = vector.shape_cast %64 : vector<8xf32> to vector<8x1xf32>
    %66 = tpu.reciprocal %65 {approx = true} : vector<8x1xf32> -> vector<8x1xf32>
    %cst_37 = arith.constant dense<0.000000e+00> : vector<8x8xf32>
    %67 = tpu.matmul %63, %57, %cst_37 {dimension_numbers = #tpu.dot_dimension_numbers<[1], [0], [0], [1], [0, 0, 1, 1], [], []>} : vector<8x8xf32>, vector<8x8xf32>, vector<8x8xf32> -> vector<8x8xf32>
    %68 = vector.broadcast %66 : vector<8x1xf32> to vector<8x8xf32>
    %69 = arith.mulf %67, %68 : vector<8x8xf32>
    %70 = vector.extract_strided_slice %10 {offsets = [0, 24], sizes = [8, 8], strides = [1, 1]} : vector<8x32xf32> to vector<8x8xf32>
    %71 = vector.extract_strided_slice %17 {offsets = [0, 24], sizes = [8, 8], strides = [1, 1]} : vector<8x32xf32> to vector<8x8xf32>
    %72 = vector.extract_strided_slice %24 {offsets = [0, 24], sizes = [8, 8], strides = [1, 1]} : vector<8x32xf32> to vector<8x8xf32>
    %cst_38 = arith.constant dense<0.000000e+00> : vector<8x8xf32>
    %73 = tpu.matmul %70, %71, %cst_38 {dimension_numbers = #tpu.dot_dimension_numbers<[1], [1], [0], [0], [0, 0, 1, 0], [], []>} : vector<8x8xf32>, vector<8x8xf32>, vector<8x8xf32> -> vector<8x8xf32>
    %cst_39 = arith.constant dense<0xFF800000> : vector<8xf32>
    %74 = vector.multi_reduction <maximumf>, %73, %cst_39 [1] : vector<8x8xf32> to vector<8xf32>
    %75 = vector.shape_cast %74 : vector<8xf32> to vector<8x1xf32>
    %76 = vector.broadcast %75 : vector<8x1xf32> to vector<8x8xf32>
    %77 = arith.subf %73, %76 : vector<8x8xf32>
    %78 = math.exp %77 : vector<8x8xf32>
    %cst_40 = arith.constant dense<0.000000e+00> : vector<8xf32>
    %79 = vector.multi_reduction <add>, %78, %cst_40 [1] : vector<8x8xf32> to vector<8xf32>
    %80 = vector.shape_cast %79 : vector<8xf32> to vector<8x1xf32>
    %81 = tpu.reciprocal %80 {approx = true} : vector<8x1xf32> -> vector<8x1xf32>
    %cst_41 = arith.constant dense<0.000000e+00> : vector<8x8xf32>
    %82 = tpu.matmul %78, %72, %cst_41 {dimension_numbers = #tpu.dot_dimension_numbers<[1], [0], [0], [1], [0, 0, 1, 1], [], []>} : vector<8x8xf32>, vector<8x8xf32>, vector<8x8xf32> -> vector<8x8xf32>
    %83 = vector.broadcast %81 : vector<8x1xf32> to vector<8x8xf32>
    %84 = arith.mulf %82, %83 : vector<8x8xf32>
    %85 = tpu.concatenate %39, %54, %69, %84 in 1 : vector<8x8xf32>, vector<8x8xf32>, vector<8x8xf32>, vector<8x8xf32> -> vector<8x32xf32>
    %c0_42 = arith.constant 0 : index
    %c0_43 = arith.constant 0 : index
    %86 = vector.load %arg9[%c0_42, %c0_43] : memref<8x32xf32, #tpu.memory_space<vmem>>, vector<8x32xf32>
    %c0_44 = arith.constant 0 : index
    %c0_45 = arith.constant 0 : index
    %c0_46 = arith.constant 0 : index
    %87 = vector.load %arg5[%c0_44, %c0_45, %c0_46] : memref<1x32x32xf32, #tpu.memory_space<vmem>>, vector<1x32x32xf32>
    %88 = vector.shape_cast %87 : vector<1x32x32xf32> to vector<32x32xf32>
    %cst_47 = arith.constant dense<0.000000e+00> : vector<8x32xf32>
    %89 = tpu.matmul %85, %88, %cst_47 {dimension_numbers = #tpu.dot_dimension_numbers<[1], [0], [0], [1], [0, 0, 1, 1], [], []>} : vector<8x32xf32>, vector<32x32xf32>, vector<8x32xf32> -> vector<8x32xf32>
    %90 = arith.addf %86, %89 : vector<8x32xf32>
    %c0_48 = arith.constant 0 : index
    %c0_49 = arith.constant 0 : index
    %91 = vector.load %arg9[%c0_48, %c0_49] : memref<8x32xf32, #tpu.memory_space<vmem>>, vector<8x32xf32>
    tpu.vector_store %arg9[%c0_48, %c0_49], %90 {strides = array<i32>} : memref<8x32xf32, #tpu.memory_space<vmem>>, vector<8x32xf32>,
    %c0_50 = arith.constant 0 : index
    %c0_51 = arith.constant 0 : index
    %92 = vector.load %arg9[%c0_50, %c0_51] : memref<8x32xf32, #tpu.memory_space<vmem>>, vector<8x32xf32>
    %c0_52 = arith.constant 0 : index
    %c0_53 = arith.constant 0 : index
    %93 = vector.load %arg7[%c0_52, %c0_53] : memref<1x32xf32, #tpu.memory_space<vmem>>, vector<1x32xf32>
    %94 = vector.broadcast %93 : vector<1x32xf32> to vector<8x32xf32>
    %95 = arith.addf %92, %94 : vector<8x32xf32>
    %c0_54 = arith.constant 0 : index
    %c0_55 = arith.constant 0 : index
    %c0_56 = arith.constant 0 : index
    %96 = vector.load %arg8[%c0_54, %c0_55, %c0_56] : memref<1x8x32xf32, #tpu.memory_space<vmem>>, vector<1x8x32xf32>
    %97 = vector.shape_cast %96 : vector<1x8x32xf32> to vector<8x32xf32>
    %98 = vector.shape_cast %95 : vector<8x32xf32> to vector<1x8x32xf32>
    tpu.vector_store %arg8[%c0_54, %c0_55, %c0_56], %98 {strides = array<i32>} : memref<1x8x32xf32, #tpu.memory_space<vmem>>, vector<1x8x32xf32>,
    return
  }
  func.func @transform_0(%arg0: i32) -> (i32, i32, i32) {
    %c0_i32 = arith.constant 0 : i32
    %c0_i32_0 = arith.constant 0 : i32
    %c0_i32_1 = arith.constant 0 : i32
    return %arg0, %c0_i32, %c0_i32_0 : i32, i32, i32
  }
  func.func @transform_1(%arg0: i32) -> (i32, i32, i32) {
    %c0_i32 = arith.constant 0 : i32
    %c0_i32_0 = arith.constant 0 : i32
    %c0_i32_1 = arith.constant 0 : i32
    %c0_i32_2 = arith.constant 0 : i32
    return %c0_i32, %c0_i32_0, %c0_i32_1 : i32, i32, i32
  }
  func.func @transform_2(%arg0: i32) -> (i32, i32, i32) {
    %c0_i32 = arith.constant 0 : i32
    %c0_i32_0 = arith.constant 0 : i32
    %c0_i32_1 = arith.constant 0 : i32
    %c0_i32_2 = arith.constant 0 : i32
    return %c0_i32, %c0_i32_0, %c0_i32_1 : i32, i32, i32
  }
  func.func @transform_3(%arg0: i32) -> (i32, i32, i32) {
    %c0_i32 = arith.constant 0 : i32
    %c0_i32_0 = arith.constant 0 : i32
    %c0_i32_1 = arith.constant 0 : i32
    %c0_i32_2 = arith.constant 0 : i32
    return %c0_i32, %c0_i32_0, %c0_i32_1 : i32, i32, i32
  }
  func.func @transform_4(%arg0: i32) -> (i32, i32, i32) {
    %c0_i32 = arith.constant 0 : i32
    %c0_i32_0 = arith.constant 0 : i32
    %c0_i32_1 = arith.constant 0 : i32
    %c0_i32_2 = arith.constant 0 : i32
    return %c0_i32, %c0_i32_0, %c0_i32_1 : i32, i32, i32
  }
  func.func @transform_5(%arg0: i32) -> (i32, i32, i32, i32) {
    %c0_i32 = arith.constant 0 : i32
    %c0_i32_0 = arith.constant 0 : i32
    %c0_i32_1 = arith.constant 0 : i32
    %c0_i32_2 = arith.constant 0 : i32
    %c0_i32_3 = arith.constant 0 : i32
    return %c0_i32, %c0_i32_0, %c0_i32_1, %c0_i32_2 : i32, i32, i32, i32
  }
  func.func @transform_6(%arg0: i32) -> (i32, i32) {
    %c0_i32 = arith.constant 0 : i32
    %c0_i32_0 = arith.constant 0 : i32
    %c0_i32_1 = arith.constant 0 : i32
    return %c0_i32, %c0_i32_0 : i32, i32
  }
  func.func @transform_7(%arg0: i32) -> (i32, i32, i32) {
    %c0_i32 = arith.constant 0 : i32
    %c0_i32_0 = arith.constant 0 : i32
    %c0_i32_1 = arith.constant 0 : i32
    return %arg0, %c0_i32, %c0_i32_0 : i32, i32, i32
  }
}

</mosaic_0001>

<llo_original>
// kernel: tpu_custom_call.1
$region0: #{tpu_custom_call.1}
  #allocation0 [shape = 'u32[]', space=smem, size = 0x4, offset = 0x4, fixed_abs, tag = 'smem constant byte address 0x4 - core index']
  #allocation1 [shape = 'u32[72,128]{1,0:T(1,128)}', space=vmem, size = 0x9000, scoped, tag = 'internal scratch']
  #allocation2 [shape = 'f32[8,32]{1,0:T(8,128)}', space=vmem, size = 0x1000, scoped, tag = 'scratch operand']
  %s0 = inlined_call_operand.hbm [shape: f32[2,8,32], index: 0, kind: input, shape index: {}]
  %s1 = inlined_call_operand.hbm [shape: f32[1,32,32], index: 1, kind: input, shape index: {}]
  %s2 = inlined_call_operand.hbm [shape: f32[1,32,32], index: 2, kind: input, shape index: {}]
  %s3 = inlined_call_operand.hbm [shape: f32[1,32,32], index: 3, kind: input, shape index: {}]
  %s4 = inlined_call_operand.hbm [shape: f32[1,32,32], index: 4, kind: input, shape index: {}]
  %s5 = inlined_call_operand.vmem [shape: f32[1,3,1,32], index: 5, kind: input, shape index: {}]
  %s6 = inlined_call_operand.vmem [shape: f32[1,32], index: 6, kind: input, shape index: {}]
  %s7 = inlined_call_operand.hbm [shape: f32[2,8,32], index: 7, kind: output, shape index: {}]
  %s8 = sld [smem:[#allocation0]]
  $region81: #{tpu_custom_call.1} parent=0
    _
  %s10 = ssub.s32 1, %s8
  %s11 = scalar_select 0, %s10, %s8
  $region1: #{tpu_custom_call.1} parent=0
    #allocation3 [shape = 'u8[8192]{0}', space=vmem, size = 0x2000, scoped, tag = 'input window, operand 0']
    #allocation4 [shape = 's32[2]{0}', space=sflag, size = 0x8, scoped, tag = 'scoped memory for tpu_custom_call.1']
    #allocation5 [shape = 's32[2]{0}', space=sflag, size = 0x8, scoped, tag = 'scoped memory for tpu_custom_call.1']
    #allocation6 [shape = 'u8[16384]{0}', space=vmem, size = 0x4000, scoped, tag = 'input window, operand 1, single buffered']
    #allocation7 [shape = 's32[1]{0}', space=sflag, size = 0x4, scoped, tag = 'scoped memory for tpu_custom_call.1']
    #allocation8 [shape = 'u8[16384]{0}', space=vmem, size = 0x4000, scoped, tag = 'input window, operand 2, single buffered']
    #allocation9 [shape = 'u8[16384]{0}', space=vmem, size = 0x4000, scoped, tag = 'input window, operand 3, single buffered']
    #allocation10 [shape = 's32[1]{0}', space=sflag, size = 0x4, scoped, tag = 'scoped memory for tpu_custom_call.1']
    #allocation11 [shape = 'u8[16384]{0}', space=vmem, size = 0x4000, scoped, tag = 'input window, operand 4, single buffered']
    #allocation12 [shape = 'u8[8192]{0}', space=vmem, size = 0x2000, scoped, tag = 'output window, operand 0']
    %12 = vsyncpa [#allocation4], 0
    %s13 = scalar_lea.sflag [#allocation4], 1
    %14 = vsyncpa %s13, 0
    %15 = vsyncpa [#allocation7], 0
    %16 = vsyncpa [#allocation10], 0
    %17 = vsyncpa [#allocation5], 0
    %s18 = scalar_lea.sflag [#allocation5], 1
    %19 = vsyncpa %s18, 0
    loop: start=0, step=1, limit=4
    $region2: #{tpu_custom_call.1} parent=1 // loop_pre_header
      _
    $region3: #{tpu_custom_call.1} parent=1 // loop_header
      %s21 = sphi 0, %s25
      %p22 = scmp.ge.s32.totalorder %s21, 4
      %s31 = sphi 0, %s33
      %s34 = sphi 0, %s31
      %s35 = sphi 0, %s34
      %s51 = sphi 0, %s35
      %s55 = sphi 0, %s55
      %s57 = sphi 0, %s55
      %s58 = sphi 0, %s57
      %s72 = sphi 0, %s58
      %s76 = sphi 0, %s76
      %s78 = sphi 0, %s76
      %s79 = sphi 0, %s78
      %s93 = sphi 0, %s79
      %s97 = sphi 0, %s97
      %s99 = sphi 0, %s97
      %s100 = sphi 0, %s99
      %s114 = sphi 0, %s100
      %s118 = sphi 0, %s118
      %s120 = sphi 0, %s118
      %s121 = sphi 0, %s120
      %s135 = sphi 0, %s121
      %s139 = sphi 0, %s139
      %s141 = sphi 0, %s139
      %s142 = sphi 0, %s141
      %s156 = sphi 0, %s142
      %s160 = sphi 0, %s160
      %s162 = sphi 0, %s160
      %s163 = sphi 0, %s162
      %s177 = sphi 0, %s163
      %s183 = sphi 0, %s185
      %s186 = sphi 0, %s183
      %s187 = sphi 0, %s186
      %s203 = sphi 0, %s187
    $region4: #{tpu_custom_call.1} parent=1 // loop_header_branch
      %24 = sbr.rel (%p22) target = $region8
    $region5: #{tpu_custom_call.1} parent=1 // loop_body
      %s26 = ssub.s32 %s21, 1
      %s27 = ssub.s32 %s21, 2
      %s28 = sadd.s32 %s21, 1
      %s29 = ssub.s32 %s21, %s28
      %p30 = scmp.eq.s32.totalorder %s29, 0
      %s32 = sadd.s32 %s31, 1
      %s33 = scalar_select %p30, %s31, %s32
      %p36 = pneg %p30
      %p37 = scmp.eq.s32.totalorder %s21, 1
      %p38 = por %p36, %p37
      %p39 = scmp.ne.s32.totalorder %s31, %s34
      %p40 = scmp.eq.s32.totalorder %s21, 0
      %p41 = por %p39, %p40
      %p42 = scmp.ne.s32.totalorder %s31, %s34
      %p43 = scmp.eq.s32.totalorder %s26, 1
      %p44 = por %p42, %p43
      %p45 = scmp.ne.s32.totalorder %s34, %s35
      %p46 = scmp.eq.s32.totalorder %s26, 0
      %p47 = por %p45, %p46
      %p48 = scmp.ne.s32.totalorder %s34, %s35
      %p49 = scmp.eq.s32.totalorder %s27, 1
      %p50 = por %p48, %p49
      %p52 = scmp.ne.s32.totalorder %s35, %s51
      %p53 = scmp.eq.s32.totalorder %s27, 0
      %p54 = por %p52, %p53
      %s56 = sadd.s32 %s55, 1
      %p59 = scmp.eq.s32.totalorder %s21, 1
      %p60 = scmp.ne.s32.totalorder %s55, %s57
      %p61 = scmp.eq.s32.totalorder %s21, 0
      %p62 = por %p60, %p61
      %p63 = scmp.ne.s32.totalorder %s55, %s57
      %p64 = scmp.eq.s32.totalorder %s26, 1
      %p65 = por %p63, %p64
      %p66 = scmp.ne.s32.totalorder %s57, %s58
      %p67 = scmp.eq.s32.totalorder %s26, 0
      %p68 = por %p66, %p67
      %p69 = scmp.ne.s32.totalorder %s57, %s58
      %p70 = scmp.eq.s32.totalorder %s27, 1
      %p71 = por %p69, %p70
      %p73 = scmp.ne.s32.totalorder %s58, %s72
      %p74 = scmp.eq.s32.totalorder %s27, 0
      %p75 = por %p73, %p74
      %s77 = sadd.s32 %s76, 1
      %p80 = scmp.eq.s32.totalorder %s21, 1
      %p81 = scmp.ne.s32.totalorder %s76, %s78
      %p82 = scmp.eq.s32.totalorder %s21, 0
      %p83 = por %p81, %p82
      %p84 = scmp.ne.s32.totalorder %s76, %s78
      %p85 = scmp.eq.s32.totalorder %s26, 1
      %p86 = por %p84, %p85
      %p87 = scmp.ne.s32.totalorder %s78, %s79
      %p88 = scmp.eq.s32.totalorder %s26, 0
      %p89 = por %p87, %p88
      %p90 = scmp.ne.s32.totalorder %s78, %s79
      %p91 = scmp.eq.s32.totalorder %s27, 1
      %p92 = por %p90, %p91
      %p94 = scmp.ne.s32.totalorder %s79, %s93
      %p95 = scmp.eq.s32.totalorder %s27, 0
      %p96 = por %p94, %p95
      %s98 = sadd.s32 %s97, 1
      %p101 = scmp.eq.s32.totalorder %s21, 1
      %p102 = scmp.ne.s32.totalorder %s97, %s99
      %p103 = scmp.eq.s32.totalorder %s21, 0
      %p104 = por %p102, %p103
      %p105 = scmp.ne.s32.totalorder %s97, %s99
      %p106 = scmp.eq.s32.totalorder %s26, 1
      %p107 = por %p105, %p106
      %p108 = scmp.ne.s32.totalorder %s99, %s100
      %p109 = scmp.eq.s32.totalorder %s26, 0
      %p110 = por %p108, %p109
      %p111 = scmp.ne.s32.totalorder %s99, %s100
      %p112 = scmp.eq.s32.totalorder %s27, 1
      %p113 = por %p111, %p112
      %p115 = scmp.ne.s32.totalorder %s100, %s114
      %p116 = scmp.eq.s32.totalorder %s27, 0
      %p117 = por %p115, %p116
      %s119 = sadd.s32 %s118, 1
      %p122 = scmp.eq.s32.totalorder %s21, 1
      %p123 = scmp.ne.s32.totalorder %s118, %s120
      %p124 = scmp.eq.s32.totalorder %s21, 0
      %p125 = por %p123, %p124
      %p126 = scmp.ne.s32.totalorder %s118, %s120
      %p127 = scmp.eq.s32.totalorder %s26, 1
      %p128 = por %p126, %p127
      %p129 = scmp.ne.s32.totalorder %s120, %s121
      %p130 = scmp.eq.s32.totalorder %s26, 0
      %p131 = por %p129, %p130
      %p132 = scmp.ne.s32.totalorder %s120, %s121
      %p133 = scmp.eq.s32.totalorder %s27, 1
      %p134 = por %p132, %p133
      %p136 = scmp.ne.s32.totalorder %s121, %s135
      %p137 = scmp.eq.s32.totalorder %s27, 0
      %p138 = por %p136, %p137
      %s140 = sadd.s32 %s139, 1
      %p143 = scmp.eq.s32.totalorder %s21, 1
      %p144 = scmp.ne.s32.totalorder %s139, %s141
      %p145 = scmp.eq.s32.totalorder %s21, 0
      %p146 = por %p144, %p145
      %p147 = scmp.ne.s32.totalorder %s139, %s141
      %p148 = scmp.eq.s32.totalorder %s26, 1
      %p149 = por %p147, %p148
      %p150 = scmp.ne.s32.totalorder %s141, %s142
      %p151 = scmp.eq.s32.totalorder %s26, 0
      %p152 = por %p150, %p151
      %p153 = scmp.ne.s32.totalorder %s141, %s142
      %p154 = scmp.eq.s32.totalorder %s27, 1
      %p155 = por %p153, %p154
      %p157 = scmp.ne.s32.totalorder %s142, %s156
      %p158 = scmp.eq.s32.totalorder %s27, 0
      %p159 = por %p157, %p158
      %s161 = sadd.s32 %s160, 1
      %p164 = scmp.eq.s32.totalorder %s21, 1
      %p165 = scmp.ne.s32.totalorder %s160, %s162
      %p166 = scmp.eq.s32.totalorder %s21, 0
      %p167 = por %p165, %p166
      %p168 = scmp.ne.s32.totalorder %s160, %s162
      %p169 = scmp.eq.s32.totalorder %s26, 1
      %p170 = por %p168, %p169
      %p171 = scmp.ne.s32.totalorder %s162, %s163
      %p172 = scmp.eq.s32.totalorder %s26, 0
      %p173 = por %p171, %p172
      %p174 = scmp.ne.s32.totalorder %s162, %s163
      %p175 = scmp.eq.s32.totalorder %s27, 1
      %p176 = por %p174, %p175
      %p178 = scmp.ne.s32.totalorder %s163, %s177
      %p179 = scmp.eq.s32.totalorder %s27, 0
      %p180 = por %p178, %p179
      %s181 = ssub.s32 %s21, %s28
      %p182 = scmp.eq.s32.totalorder %s181, 0
      %s184 = sadd.s32 %s183, 1
      %s185 = scalar_select %p182, %s183, %s184
      %p188 = pneg %p182
      %p189 = scmp.eq.s32.totalorder %s21, 1
      %p190 = por %p188, %p189
      %p191 = scmp.ne.s32.totalorder %s183, %s186
      %p192 = scmp.eq.s32.totalorder %s21, 0
      %p193 = por %p191, %p192
      %p194 = scmp.ne.s32.totalorder %s183, %s186
      %p195 = scmp.eq.s32.totalorder %s26, 1
      %p196 = por %p194, %p195
      %p197 = scmp.ne.s32.totalorder %s186, %s187
      %p198 = scmp.eq.s32.totalorder %s26, 0
      %p199 = por %p197, %p198
      %p200 = scmp.ne.s32.totalorder %s186, %s187
      %p201 = scmp.eq.s32.totalorder %s27, 1
      %p202 = por %p200, %p201
      %p204 = scmp.ne.s32.totalorder %s187, %s203
      %p205 = scmp.eq.s32.totalorder %s27, 0
      %p206 = por %p204, %p205
      %p207 = scmp.le.s32.totalorder 1, %s21
      %p208 = scmp.lt.s32.totalorder %s21, 3
      %p209 = pnand %p207, %p208
      %p210 = pneg %p209
      // Predicated region
      $region9: #{tpu_custom_call.1} parent=5 // pred_check
        _
      $region10: #{tpu_custom_call.1} parent=5 // pred_check_branch
        %212 = sbr.rel (%p209) target = $region12
      $region11: #{tpu_custom_call.1} parent=5 // pred_region
        %s213 = ssub.s32 %s21, 1
        // Predicated region
        $region13: #{tpu_custom_call.1} parent=11 // pred_check
          %p214 = pneg %p68
        $region14: #{tpu_custom_call.1} parent=11 // pred_check_branch
          %216 = sbr.rel (%p214) target = $region16
        $region15: #{tpu_custom_call.1} parent=11 // pred_region
          %218 = vsyncadd [#allocation7], 0
          %s219 = sshll.u32 %s1, 4
          %s220 = int_to_ptr.hbm [resolvable:$true] %s219
          %s221 = sshll.u32 [#allocation6], 4
          %s222 = int_to_ptr.vmem [resolvable:$true] %s221
          %227 = dma.hbm_to_vmem [thread:$0]  %s220, 512, %s222, [#allocation7], 128, 128, 8
        $region16: #{tpu_custom_call.1} parent=11 // pred_fallthru
          _
        // Predicated region
        $region17: #{tpu_custom_call.1} parent=11 // pred_check
          %p228 = pneg %p89
        $region18: #{tpu_custom_call.1} parent=11 // pred_check_branch
          %230 = sbr.rel (%p228) target = $region20
        $region19: #{tpu_custom_call.1} parent=11 // pred_region
          %232 = vsyncadd [#allocation7], 0
          %s233 = sshll.u32 %s2, 4
          %s234 = int_to_ptr.hbm [resolvable:$true] %s233
          %s235 = sshll.u32 [#allocation8], 4
          %s236 = int_to_ptr.vmem [resolvable:$true] %s235
          %241 = dma.hbm_to_vmem [thread:$0]  %s234, 512, %s236, [#allocation7], 128, 128, 8
        $region20: #{tpu_custom_call.1} parent=11 // pred_fallthru
          _
        // Predicated region
        $region21: #{tpu_custom_call.1} parent=11 // pred_check
          %p242 = pneg %p110
        $region22: #{tpu_custom_call.1} parent=11 // pred_check_branch
          %244 = sbr.rel (%p242) target = $region24
        $region23: #{tpu_custom_call.1} parent=11 // pred_region
          %246 = vsyncadd [#allocation10], 0
          %s247 = sshll.u32 %s3, 4
          %s248 = int_to_ptr.hbm [resolvable:$true] %s247
          %s249 = sshll.u32 [#allocation9], 4
          %s250 = int_to_ptr.vmem [resolvable:$true] %s249
          %255 = dma.hbm_to_vmem [thread:$0]  %s248, 512, %s250, [#allocation10], 128, 128, 8
        $region24: #{tpu_custom_call.1} parent=11 // pred_fallthru
          _
        // Predicated region
        $region25: #{tpu_custom_call.1} parent=11 // pred_check
          %p256 = pneg %p131
        $region26: #{tpu_custom_call.1} parent=11 // pred_check_branch
          %258 = sbr.rel (%p256) target = $region28
        $region27: #{tpu_custom_call.1} parent=11 // pred_region
          %260 = vsyncadd [#allocation10], 0
          %s261 = sshll.u32 %s4, 4
          %s262 = int_to_ptr.hbm [resolvable:$true] %s261
          %s263 = sshll.u32 [#allocation11], 4
          %s264 = int_to_ptr.vmem [resolvable:$true] %s263
          %269 = dma.hbm_to_vmem [thread:$0]  %s262, 512, %s264, [#allocation10], 128, 128, 8
        $region28: #{tpu_custom_call.1} parent=11 // pred_fallthru
          _
        // Predicated region
        $region29: #{tpu_custom_call.1} parent=11 // pred_check
          %p270 = pneg %p152
        $region30: #{tpu_custom_call.1} parent=11 // pred_check_branch
          %272 = sbr.rel (%p270) target = $region32
        $region31: #{tpu_custom_call.1} parent=11 // pred_region
          _
        $region32: #{tpu_custom_call.1} parent=11 // pred_fallthru
          _
        // Predicated region
        $region33: #{tpu_custom_call.1} parent=11 // pred_check
          %p273 = pneg %p173
        $region34: #{tpu_custom_call.1} parent=11 // pred_check_branch
          %275 = sbr.rel (%p273) target = $region36
        $region35: #{tpu_custom_call.1} parent=11 // pred_region
          _
        $region36: #{tpu_custom_call.1} parent=11 // pred_fallthru
          _
      $region12: #{tpu_custom_call.1} parent=5 // pred_fallthru
        _
      %p276 = scmp.lt.s32.totalorder %s21, 2
      // Predicated region
      $region37: #{tpu_custom_call.1} parent=5 // pred_check
        %p277 = pneg %p276
      $region38: #{tpu_custom_call.1} parent=5 // pred_check_branch
        %279 = sbr.rel (%p277) target = $region40
      $region39: #{tpu_custom_call.1} parent=5 // pred_region
        // Predicated region
        $region41: #{tpu_custom_call.1} parent=39 // pred_check
          %p280 = pneg %p41
        $region42: #{tpu_custom_call.1} parent=39 // pred_check_branch
          %282 = sbr.rel (%p280) target = $region44
        $region43: #{tpu_custom_call.1} parent=39 // pred_region
          %s283 = sand.u32 %s31, 1
          %s284 = scalar_lea.sflag [#allocation4], %s283
          %s285 = sand.u32 %s31, 1
          %s286 = smul.addr %s285, 8
          %s287 = scalar_lea.vmem [#allocation3], %s286
          %289 = vsyncadd %s284, 0
          %s290 = smul.addr %s21, 8
          %s291 = scalar_lea.hbm %s0, %s290
          %s293 = sshll.u32 %s291, 4
          %s294 = int_to_ptr.hbm [resolvable:$true] %s293
          %s295 = sshll.u32 %s287, 4
          %s296 = int_to_ptr.vmem [resolvable:$true] %s295
          %298 = dma.hbm_to_vmem [thread:$0]  %s294, 128, %s296, %s284
        $region44: #{tpu_custom_call.1} parent=39 // pred_fallthru
          _
      $region40: #{tpu_custom_call.1} parent=5 // pred_fallthru
        _
      %p299 = scmp.le.s32.totalorder 1, %s21
      %p300 = scmp.lt.s32.totalorder %s21, 3
      %p301 = pnand %p299, %p300
      %p302 = pneg %p301
      // Predicated region
      $region45: #{tpu_custom_call.1} parent=5 // pred_check
        _
      $region46: #{tpu_custom_call.1} parent=5 // pred_check_branch
        %304 = sbr.rel (%p301) target = $region48
      $region47: #{tpu_custom_call.1} parent=5 // pred_region
        %s305 = ssub.s32 %s21, 1
        %s306 = sand.u32 %s34, 1
        %s307 = scalar_lea.sflag [#allocation4], %s306
        %s308 = sand.u32 %s34, 1
        %s309 = smul.addr %s308, 8
        %s310 = scalar_lea.vmem [#allocation3], %s309
        // Predicated region
        $region49: #{tpu_custom_call.1} parent=47 // pred_check
          %p311 = pneg %p47
        $region50: #{tpu_custom_call.1} parent=47 // pred_check_branch
          %313 = sbr.rel (%p311) target = $region52
        $region51: #{tpu_custom_call.1} parent=47 // pred_region
          %315 = dma.done %s307, 128
        $region52: #{tpu_custom_call.1} parent=47 // pred_fallthru
          _
        // Predicated region
        $region53: #{tpu_custom_call.1} parent=47 // pred_check
          %p316 = pneg %p68
        $region54: #{tpu_custom_call.1} parent=47 // pred_check_branch
          %318 = sbr.rel (%p316) target = $region56
        $region55: #{tpu_custom_call.1} parent=47 // pred_region
          %320 = dma.done [#allocation7], 512
        $region56: #{tpu_custom_call.1} parent=47 // pred_fallthru
          _
        // Predicated region
        $region57: #{tpu_custom_call.1} parent=47 // pred_check
          %p321 = pneg %p89
        $region58: #{tpu_custom_call.1} parent=47 // pred_check_branch
          %323 = sbr.rel (%p321) target = $region60
        $region59: #{tpu_custom_call.1} parent=47 // pred_region
          %325 = dma.done [#allocation7], 512
        $region60: #{tpu_custom_call.1} parent=47 // pred_fallthru
          _
        // Predicated region
        $region61: #{tpu_custom_call.1} parent=47 // pred_check
          %p326 = pneg %p110
        $region62: #{tpu_custom_call.1} parent=47 // pred_check_branch
          %328 = sbr.rel (%p326) target = $region64
        $region63: #{tpu_custom_call.1} parent=47 // pred_region
          %330 = dma.done [#allocation10], 512
        $region64: #{tpu_custom_call.1} parent=47 // pred_fallthru
          _
        // Predicated region
        $region65: #{tpu_custom_call.1} parent=47 // pred_check
          %p331 = pneg %p131
        $region66: #{tpu_custom_call.1} parent=47 // pred_check_branch
          %333 = sbr.rel (%p331) target = $region68
        $region67: #{tpu_custom_call.1} parent=47 // pred_region
          %335 = dma.done [#allocation10], 512
        $region68: #{tpu_custom_call.1} parent=47 // pred_fallthru
          _
        %s336 = sand.u32 %s34, 1
        %s337 = scalar_lea.sflag [#allocation4], %s336
        %s338 = sand.u32 %s34, 1
        %s339 = smul.addr %s338, 8
        %s340 = scalar_lea.vmem [#allocation3], %s339
        %p341 = pneg %p47
        %p342 = pneg %p44
        %p343 = pneg %p68
        %p344 = pneg %p65
        %p345 = pneg %p89
        %p346 = pneg %p86
        %p347 = pneg %p110
        %p348 = pneg %p107
        %p349 = pneg %p131
        %p350 = pneg %p128
        %p351 = pneg %p152
        %p352 = pneg %p149
        %p353 = pneg %p173
        %p354 = pneg %p170
        %p355 = pneg %p199
        %p356 = pneg %p196
        %s357 = sand.u32 %s186, 1
        %s358 = scalar_lea.sflag [#allocation5], %s357
        %s359 = sand.u32 %s186, 1
        %s360 = smul.addr %s359, 8
        %s361 = scalar_lea.vmem [#allocation12], %s360
        %v362 = vld [vmem:[%s310] sm:$0xff]
        %vm363 = vcmask 261120
        %364 = vst.msk [vmem:[#allocation2] sm:$0xff] %vm363, 0.0
        %v365 = vld [vmem:[#allocation6] sm:$0xff]
        %v366 = vld [vmem:[#allocation6 + $0x8] sm:$0xff]
        %v367 = vld [vmem:[#allocation6 + $0x10] sm:$0xff]
        %v368 = vld [vmem:[#allocation6 + $0x18] sm:$0xff]
        %v369 = vld [vmem:[%s5] sm:$0x1]
        %v371 = vperm.slane %v369, 0
        %v374 = vsel %vm363, %v362, 0
        %376 = vmatpush.msra.mxu0 0.0
        %377 = vmatpush.msra.mxu0 0.0
        %378 = vmatpush.msra.mxu0 0.0
        %379 = vmatpush.msra.mxu0 0.0
        %380 = vmatpush.msra.mxu0 0.0
        %381 = vmatpush.msra.mxu0 0.0
        %382 = vmatpush.msra.mxu0 0.0
        %383 = vmatpush.msra.mxu0 0.0
        %384 = vmatpush.msra.mxu0 0.0
        %385 = vmatpush.msra.mxu0 0.0
        %386 = vmatpush.msra.mxu0 0.0
        %387 = vmatpush.msra.mxu0 0.0
        %388 = vmatpush.msra.mxu0 %v368
        %389 = vmatpush.msra.mxu0 %v367
        %390 = vmatpush.msra.mxu0 %v366
        %391 = vmatpush.msra.mxu0 %v365
        %392 = vmatmul.f32.gmra.mxu0 %v374
        %v393 = vpop.f32.mrf.mxu0
        %v394 = vadd.f32 %v371, %v393
        %395 = vdwg.mxu0
        %v396 = vld [vmem:[#allocation8] sm:$0xff]
        %v397 = vld [vmem:[#allocation8 + $0x8] sm:$0xff]
        %v398 = vld [vmem:[#allocation8 + $0x10] sm:$0xff]
        %v399 = vld [vmem:[#allocation8 + $0x18] sm:$0xff]
        %s400 = scalar_lea.vmem %s5, 1
        %v401 = vld [vmem:[%s400] sm:$0x1]
        %v403 = vperm.slane %v401, 0
        %405 = vmatpush.msra.mxu0 0.0
        %406 = vmatpush.msra.mxu0 0.0
        %407 = vmatpush.msra.mxu0 0.0
        %408 = vmatpush.msra.mxu0 0.0
        %409 = vmatpush.msra.mxu0 0.0
        %410 = vmatpush.msra.mxu0 0.0
        %411 = vmatpush.msra.mxu0 0.0
        %412 = vmatpush.msra.mxu0 0.0
        %413 = vmatpush.msra.mxu0 0.0
        %414 = vmatpush.msra.mxu0 0.0
        %415 = vmatpush.msra.mxu0 0.0
        %416 = vmatpush.msra.mxu0 0.0
        %417 = vmatpush.msra.mxu0 %v399
        %418 = vmatpush.msra.mxu0 %v398
        %419 = vmatpush.msra.mxu0 %v397
        %420 = vmatpush.msra.mxu0 %v396
        %421 = vmatmul.f32.gmra.mxu0 %v374
        %v422 = vpop.f32.mrf.mxu0
        %v423 = vadd.f32 %v403, %v422
        %424 = vdwg.mxu0
        %v425 = vld [vmem:[#allocation9] sm:$0xff]
        %v426 = vld [vmem:[#allocation9 + $0x8] sm:$0xff]
        %v427 = vld [vmem:[#allocation9 + $0x10] sm:$0xff]
        %v428 = vld [vmem:[#allocation9 + $0x18] sm:$0xff]
        %s429 = scalar_lea.vmem %s5, 2
        %v430 = vld [vmem:[%s429] sm:$0x1]
        %v432 = vperm.slane %v430, 0
        %434 = vmatpush.msra.mxu0 0.0
        %435 = vmatpush.msra.mxu0 0.0
        %436 = vmatpush.msra.mxu0 0.0
        %437 = vmatpush.msra.mxu0 0.0
        %438 = vmatpush.msra.mxu0 0.0
        %439 = vmatpush.msra.mxu0 0.0
        %440 = vmatpush.msra.mxu0 0.0
        %441 = vmatpush.msra.mxu0 0.0
        %442 = vmatpush.msra.mxu0 0.0
        %443 = vmatpush.msra.mxu0 0.0
        %444 = vmatpush.msra.mxu0 0.0
        %445 = vmatpush.msra.mxu0 0.0
        %446 = vmatpush.msra.mxu0 %v428
        %447 = vmatpush.msra.mxu0 %v427
        %448 = vmatpush.msra.mxu0 %v426
        %449 = vmatpush.msra.mxu0 %v425
        %450 = vmatmul.f32.gmra.mxu0 %v374
        %v451 = vpop.f32.mrf.mxu0
        %v452 = vadd.f32 %v432, %v451
        %453 = vdwg.mxu0
        %vm454 = vcmask 64512
        %v456 = vsel %vm454, %v394, 0
        %v459 = vsel %vm454, %v423, 0
        %461 = vmatpush.xpose.msra.mxu0 0.0
        %462 = vmatpush.xpose.msra.mxu0 0.0
        %463 = vmatpush.xpose.msra.mxu0 0.0
        %464 = vmatpush.xpose.msra.mxu0 0.0
        %465 = vmatpush.xpose.msra.mxu0 0.0
        %466 = vmatpush.xpose.msra.mxu0 0.0
        %467 = vmatpush.xpose.msra.mxu0 0.0
        %468 = vmatpush.xpose.msra.mxu0 0.0
        %469 = vmatpush.xpose.msra.mxu0 0.0
        %470 = vmatpush.xpose.msra.mxu0 0.0
        %471 = vmatpush.xpose.msra.mxu0 0.0
        %472 = vmatpush.xpose.msra.mxu0 0.0
        %473 = vmatpush.xpose.msra.mxu0 0.0
        %474 = vmatpush.xpose.msra.mxu0 0.0
        %475 = vmatpush.xpose.msra.mxu0 0.0
        %476 = vmatpush.xpose.msra.mxu0 %v459
        %477 = vmatmul.f32.gmra.mxu0 %v456
        %v478 = vpop.f32.mrf.mxu0
        %v479 = vadd.f32 0.0, %v478
        %480 = vdwg.mxu0
        %v481 = vsel %vm454, %v479, -inf
        %482 = vmax.xlane.f32.xlu0 %v481
        %v483 = vpop.xlane.xlu0 %482
        %v484 = vsub.f32 %v479, %v483
        %v485 = vmul.f32 %v484, 1.442695
        %v486 = vpow.pop %v485
        %v487 = vsel %vm454, %v486, 0.0
        %488 = vadd.xlane.f32.xlu0 %v487
        %v489 = vpop.xlane.xlu0 %488
        %v490 = vrcp.pop %v489
        %v492 = vsel %vm454, %v486, 0
        %494 = vmatpush.msra.mxu0 0.0
        %495 = vmatpush.msra.mxu0 0.0
        %496 = vmatpush.msra.mxu0 0.0
        %497 = vmatpush.msra.mxu0 0.0
        %498 = vmatpush.msra.mxu0 0.0
        %499 = vmatpush.msra.mxu0 0.0
        %500 = vmatpush.msra.mxu0 0.0
        %501 = vmatpush.msra.mxu0 0.0
        %502 = vmatpush.msra.mxu0 0.0
        %503 = vmatpush.msra.mxu0 0.0
        %504 = vmatpush.msra.mxu0 0.0
        %505 = vmatpush.msra.mxu0 0.0
        %506 = vmatpush.msra.mxu0 0.0
        %507 = vmatpush.msra.mxu0 0.0
        %508 = vmatpush.msra.mxu0 0.0
        %509 = vmatpush.msra.mxu0 %v452
        %510 = vmatmul.f32.gmra.mxu0 %v492
        %v511 = vpop.f32.mrf.mxu0
        %v512 = vadd.f32 0.0, %v511
        %513 = vdwg.mxu0
        %v514 = vmul.f32 %v512, %v490
        %515 = vrot.lane.b32.xlu0 %v394, 120
        %v516 = vpop.permute.xlu0 %515
        %517 = vrot.lane.b32.xlu0 %v423, 120
        %v518 = vpop.permute.xlu0 %517
        %v519 = vsel %vm454, %v516, 0
        %v521 = vsel %vm454, %v518, 0
        %523 = vmatpush.xpose.msra.mxu0 0.0
        %524 = vmatpush.xpose.msra.mxu0 0.0
        %525 = vmatpush.xpose.msra.mxu0 0.0
        %526 = vmatpush.xpose.msra.mxu0 0.0
        %527 = vmatpush.xpose.msra.mxu0 0.0
        %528 = vmatpush.xpose.msra.mxu0 0.0
        %529 = vmatpush.xpose.msra.mxu0 0.0
        %530 = vmatpush.xpose.msra.mxu0 0.0
        %531 = vmatpush.xpose.msra.mxu0 0.0
        %532 = vmatpush.xpose.msra.mxu0 0.0
        %533 = vmatpush.xpose.msra.mxu0 0.0
        %534 = vmatpush.xpose.msra.mxu0 0.0
        %535 = vmatpush.xpose.msra.mxu0 0.0
        %536 = vmatpush.xpose.msra.mxu0 0.0
        %537 = vmatpush.xpose.msra.mxu0 0.0
        %538 = vmatpush.xpose.msra.mxu0 %v521
        %539 = vmatmul.f32.gmra.mxu0 %v519
        %v540 = vpop.f32.mrf.mxu0
        %v541 = vadd.f32 0.0, %v540
        %542 = vdwg.mxu0
        %v543 = vsel %vm454, %v541, -inf
        %544 = vmax.xlane.f32.xlu0 %v543
        %v545 = vpop.xlane.xlu0 %544
        %v546 = vsub.f32 %v541, %v545
        %v547 = vmul.f32 %v546, 1.442695
        %v548 = vpow.pop %v547
        %v549 = vsel %vm454, %v548, 0.0
        %550 = vadd.xlane.f32.xlu0 %v549
        %v551 = vpop.xlane.xlu0 %550
        %v552 = vrcp.pop %v551
        %554 = vrot.lane.b32.xlu0 %v452, 120
        %v555 = vpop.permute.xlu0 %554
        %v558 = vsel %vm454, %v548, 0
        %560 = vmatpush.msra.mxu0 0.0
        %561 = vmatpush.msra.mxu0 0.0
        %562 = vmatpush.msra.mxu0 0.0
        %563 = vmatpush.msra.mxu0 0.0
        %564 = vmatpush.msra.mxu0 0.0
        %565 = vmatpush.msra.mxu0 0.0
        %566 = vmatpush.msra.mxu0 0.0
        %567 = vmatpush.msra.mxu0 0.0
        %568 = vmatpush.msra.mxu0 0.0
        %569 = vmatpush.msra.mxu0 0.0
        %570 = vmatpush.msra.mxu0 0.0
        %571 = vmatpush.msra.mxu0 0.0
        %572 = vmatpush.msra.mxu0 0.0
        %573 = vmatpush.msra.mxu0 0.0
        %574 = vmatpush.msra.mxu0 0.0
        %575 = vmatpush.msra.mxu0 %v555
        %576 = vmatmul.f32.gmra.mxu0 %v558
        %v577 = vpop.f32.mrf.mxu0
        %v578 = vadd.f32 0.0, %v577
        %579 = vdwg.mxu0
        %v580 = vmul.f32 %v578, %v552
        %581 = vrot.lane.b32.xlu0 %v394, 112
        %v582 = vpop.permute.xlu0 %581
        %583 = vrot.lane.b32.xlu0 %v423, 112
        %v584 = vpop.permute.xlu0 %583
        %v585 = vsel %vm454, %v582, 0
        %v587 = vsel %vm454, %v584, 0
        %589 = vmatpush.xpose.msra.mxu0 0.0
        %590 = vmatpush.xpose.msra.mxu0 0.0
        %591 = vmatpush.xpose.msra.mxu0 0.0
        %592 = vmatpush.xpose.msra.mxu0 0.0
        %593 = vmatpush.xpose.msra.mxu0 0.0
        %594 = vmatpush.xpose.msra.mxu0 0.0
        %595 = vmatpush.xpose.msra.mxu0 0.0
        %596 = vmatpush.xpose.msra.mxu0 0.0
        %597 = vmatpush.xpose.msra.mxu0 0.0
        %598 = vmatpush.xpose.msra.mxu0 0.0
        %599 = vmatpush.xpose.msra.mxu0 0.0
        %600 = vmatpush.xpose.msra.mxu0 0.0
        %601 = vmatpush.xpose.msra.mxu0 0.0
        %602 = vmatpush.xpose.msra.mxu0 0.0
        %603 = vmatpush.xpose.msra.mxu0 0.0
        %604 = vmatpush.xpose.msra.mxu0 %v587
        %605 = vmatmul.f32.gmra.mxu0 %v585
        %v606 = vpop.f32.mrf.mxu0
        %v607 = vadd.f32 0.0, %v606
        %608 = vdwg.mxu0
        %v609 = vsel %vm454, %v607, -inf
        %610 = vmax.xlane.f32.xlu0 %v609
        %v611 = vpop.xlane.xlu0 %610
        %v612 = vsub.f32 %v607, %v611
        %v613 = vmul.f32 %v612, 1.442695
        %v614 = vpow.pop %v613
        %v615 = vsel %vm454, %v614, 0.0
        %616 = vadd.xlane.f32.xlu0 %v615
        %v617 = vpop.xlane.xlu0 %616
        %v618 = vrcp.pop %v617
        %619 = vrot.lane.b32.xlu0 %v452, 112
        %v620 = vpop.permute.xlu0 %619
        %v623 = vsel %vm454, %v614, 0
        %625 = vmatpush.msra.mxu0 0.0
        %626 = vmatpush.msra.mxu0 0.0
        %627 = vmatpush.msra.mxu0 0.0
        %628 = vmatpush.msra.mxu0 0.0
        %629 = vmatpush.msra.mxu0 0.0
        %630 = vmatpush.msra.mxu0 0.0
        %631 = vmatpush.msra.mxu0 0.0
        %632 = vmatpush.msra.mxu0 0.0
        %633 = vmatpush.msra.mxu0 0.0
        %634 = vmatpush.msra.mxu0 0.0
        %635 = vmatpush.msra.mxu0 0.0
        %636 = vmatpush.msra.mxu0 0.0
        %637 = vmatpush.msra.mxu0 0.0
        %638 = vmatpush.msra.mxu0 0.0
        %639 = vmatpush.msra.mxu0 0.0
        %640 = vmatpush.msra.mxu0 %v620
        %641 = vmatmul.f32.gmra.mxu0 %v623
        %v642 = vpop.f32.mrf.mxu0
        %v643 = vadd.f32 0.0, %v642
        %644 = vdwg.mxu0
        %v645 = vmul.f32 %v643, %v618
        %646 = vrot.lane.b32.xlu0 %v394, 104
        %v647 = vpop.permute.xlu0 %646
        %648 = vrot.lane.b32.xlu0 %v423, 104
        %v649 = vpop.permute.xlu0 %648
        %v650 = vsel %vm454, %v647, 0
        %v652 = vsel %vm454, %v649, 0
        %654 = vmatpush.xpose.msra.mxu0 0.0
        %655 = vmatpush.xpose.msra.mxu0 0.0
        %656 = vmatpush.xpose.msra.mxu0 0.0
        %657 = vmatpush.xpose.msra.mxu0 0.0
        %658 = vmatpush.xpose.msra.mxu0 0.0
        %659 = vmatpush.xpose.msra.mxu0 0.0
        %660 = vmatpush.xpose.msra.mxu0 0.0
        %661 = vmatpush.xpose.msra.mxu0 0.0
        %662 = vmatpush.xpose.msra.mxu0 0.0
        %663 = vmatpush.xpose.msra.mxu0 0.0
        %664 = vmatpush.xpose.msra.mxu0 0.0
        %665 = vmatpush.xpose.msra.mxu0 0.0
        %666 = vmatpush.xpose.msra.mxu0 0.0
        %667 = vmatpush.xpose.msra.mxu0 0.0
        %668 = vmatpush.xpose.msra.mxu0 0.0
        %669 = vmatpush.xpose.msra.mxu0 %v652
        %670 = vmatmul.f32.gmra.mxu0 %v650
        %v671 = vpop.f32.mrf.mxu0
        %v672 = vadd.f32 0.0, %v671
        %673 = vdwg.mxu0
        %v674 = vsel %vm454, %v672, -inf
        %675 = vmax.xlane.f32.xlu0 %v674
        %v676 = vpop.xlane.xlu0 %675
        %v677 = vsub.f32 %v672, %v676
        %v678 = vmul.f32 %v677, 1.442695
        %v679 = vpow.pop %v678
        %v680 = vsel %vm454, %v679, 0.0
        %681 = vadd.xlane.f32.xlu0 %v680
        %v682 = vpop.xlane.xlu0 %681
        %v683 = vrcp.pop %v682
        %684 = vrot.lane.b32.xlu0 %v452, 104
        %v685 = vpop.permute.xlu0 %684
        %v688 = vsel %vm454, %v679, 0
        %690 = vmatpush.msra.mxu0 0.0
        %691 = vmatpush.msra.mxu0 0.0
        %692 = vmatpush.msra.mxu0 0.0
        %693 = vmatpush.msra.mxu0 0.0
        %694 = vmatpush.msra.mxu0 0.0
        %695 = vmatpush.msra.mxu0 0.0
        %696 = vmatpush.msra.mxu0 0.0
        %697 = vmatpush.msra.mxu0 0.0
        %698 = vmatpush.msra.mxu0 0.0
        %699 = vmatpush.msra.mxu0 0.0
        %700 = vmatpush.msra.mxu0 0.0
        %701 = vmatpush.msra.mxu0 0.0
        %702 = vmatpush.msra.mxu0 0.0
        %703 = vmatpush.msra.mxu0 0.0
        %704 = vmatpush.msra.mxu0 0.0
        %705 = vmatpush.msra.mxu0 %v685
        %706 = vmatmul.f32.gmra.mxu0 %v688
        %v707 = vpop.f32.mrf.mxu0
        %v708 = vadd.f32 0.0, %v707
        %709 = vdwg.mxu0
        %v710 = vmul.f32 %v708, %v683
        %712 = vrot.lane.b32.xlu0 %v580, 8
        %v713 = vpop.permute.xlu0 %712
        %716 = vrot.lane.b32.xlu0 %v645, 16
        %v717 = vpop.permute.xlu0 %716
        %720 = vrot.lane.b32.xlu0 %v710, 24
        %v721 = vpop.permute.xlu0 %720
        %v723 = vsel %vm454, %v514, %v713
        %vm724 = vcmask 130048
        %v725 = vsel %vm724, %v723, %v717
        %vm726 = vcmask 195584
        %v727 = vsel %vm726, %v725, %v721
        %v728 = vld [vmem:[#allocation2] sm:$0xff]
        %v729 = vld [vmem:[#allocation11] sm:$0xff]
        %v730 = vld [vmem:[#allocation11 + $0x8] sm:$0xff]
        %v731 = vld [vmem:[#allocation11 + $0x10] sm:$0xff]
        %v732 = vld [vmem:[#allocation11 + $0x18] sm:$0xff]
        %v734 = vsel %vm363, %v727, 0
        %736 = vmatpush.msra.mxu0 0.0
        %737 = vmatpush.msra.mxu0 0.0
        %738 = vmatpush.msra.mxu0 0.0
        %739 = vmatpush.msra.mxu0 0.0
        %740 = vmatpush.msra.mxu0 0.0
        %741 = vmatpush.msra.mxu0 0.0
        %742 = vmatpush.msra.mxu0 0.0
        %743 = vmatpush.msra.mxu0 0.0
        %744 = vmatpush.msra.mxu0 0.0
        %745 = vmatpush.msra.mxu0 0.0
        %746 = vmatpush.msra.mxu0 0.0
        %747 = vmatpush.msra.mxu0 0.0
        %748 = vmatpush.msra.mxu0 %v732
        %749 = vmatpush.msra.mxu0 %v731
        %750 = vmatpush.msra.mxu0 %v730
        %751 = vmatpush.msra.mxu0 %v729
        %752 = vmatmul.f32.gmra.mxu0 %v734
        %v753 = vpop.f32.mrf.mxu0
        %v754 = vadd.f32 0.0, %v753
        %755 = vdwg.mxu0
        %v756 = vadd.f32 %v728, %v754
        %757 = vst.msk [vmem:[#allocation2] sm:$0xff] %vm363, %v756
        %v758 = vld [vmem:[#allocation2] sm:$0xff]
        %v759 = vld [vmem:[%s6] sm:$0x1]
        %v761 = vperm.slane %v759, 0
        %v763 = vadd.f32 %v758, %v761
        %764 = vst.msk [vmem:[%s361] sm:$0xff] %vm363, %v763
        %s765 = sand.u32 %s186, 1
        %s766 = scalar_lea.sflag [#allocation5], %s765
        %s767 = sand.u32 %s186, 1
        %s768 = smul.addr %s767, 8
        %s769 = scalar_lea.vmem [#allocation12], %s768
        // Predicated region
        $region69: #{tpu_custom_call.1} parent=47 // pred_check
          %p770 = pneg %p196
        $region70: #{tpu_custom_call.1} parent=47 // pred_check_branch
          %772 = sbr.rel (%p770) target = $region72
        $region71: #{tpu_custom_call.1} parent=47 // pred_region
          %774 = vsyncadd %s766, 0
          %s775 = smul.addr %s26, 8
          %s776 = scalar_lea.hbm %s7, %s775
          %s778 = sshll.u32 %s769, 4
          %s779 = int_to_ptr.vmem [resolvable:$true] %s778
          %s780 = sshll.u32 %s776, 4
          %s781 = int_to_ptr.hbm [resolvable:$true] %s780
          %783 = dma.vmem_to_hbm [thread:$0]  %s779, 128, %s781, %s766
        $region72: #{tpu_custom_call.1} parent=47 // pred_fallthru
          _
      $region48: #{tpu_custom_call.1} parent=5 // pred_fallthru
        _
      %p784 = scmp.le.s32.totalorder 2, %s21
      // Predicated region
      $region73: #{tpu_custom_call.1} parent=5 // pred_check
        %p785 = pneg %p784
      $region74: #{tpu_custom_call.1} parent=5 // pred_check_branch
        %787 = sbr.rel (%p785) target = $region76
      $region75: #{tpu_custom_call.1} parent=5 // pred_region
        %s788 = ssub.s32 %s21, 2
        // Predicated region
        $region77: #{tpu_custom_call.1} parent=75 // pred_check
          %p789 = pneg %p202
        $region78: #{tpu_custom_call.1} parent=75 // pred_check_branch
          %791 = sbr.rel (%p789) target = $region80
        $region79: #{tpu_custom_call.1} parent=75 // pred_region
          %s792 = sand.u32 %s187, 1
          %s793 = scalar_lea.sflag [#allocation5], %s792
          %s794 = sand.u32 %s187, 1
          %s795 = smul.addr %s794, 8
          %s796 = scalar_lea.vmem [#allocation12], %s795
          %798 = dma.done %s793, 128
        $region80: #{tpu_custom_call.1} parent=75 // pred_fallthru
          _
      $region76: #{tpu_custom_call.1} parent=5 // pred_fallthru
        _
    $region6: #{tpu_custom_call.1} parent=1 // loop_footer
      %s25 = sadd.s32 1, %s21
    $region7: #{tpu_custom_call.1} parent=1 // loop_footer_branch
      %20 = sbr.rel target = $region3
    $region8: #{tpu_custom_call.1} parent=1 // loop_exit
      _
    %799 = vsyncpa [#allocation4], 1
    %s800 = scalar_lea.sflag [#allocation4], 1
    %801 = vsyncpa %s800, 1
    %802 = vsyncpa [#allocation7], 1
    %803 = vsyncpa [#allocation10], 1
    %804 = vsyncpa [#allocation5], 1
    %s805 = scalar_lea.sflag [#allocation5], 1
    %806 = vsyncpa %s805, 1

</llo_original>
